<compile_context>
chip_gen: v5e
topology: v5e:2x2
jax: 0.10.0
libtpu: 0.0.40
codegen_flags: <defaults>
</compile_context>

<pallas_src>
import jax
import jax.numpy as jnp
from jax.experimental import pallas as pl
from jax.experimental.pallas import tpu as pltpu


def _round_up(x, m):
    return ((x + m - 1) // m) * m


def _film_kernel(x_ref, gamma_ref, beta_ref, out_ref):
    # x_ref, out_ref: (R, L); gamma_ref, beta_ref: (R, 1) f32, broadcast over
    # lanes.  Compute in f32, cast once on the store.
    x = x_ref[...].astype(jnp.float32)
    out_ref[...] = (gamma_ref[...] * x + beta_ref[...]).astype(out_ref.dtype)


def film(x, gamma, beta, *, target_block_bytes=4 * 1024 * 1024):
    """FiLM: out = gamma[:, :, None, None] * x + beta[:, :, None, None].

    x: (N, C, H, W); gamma, beta: (N, C).  Returns (N, C, H, W).
    """
    N, C, H, W = x.shape
    rows = N * C
    HW = H * W
    itemsize = jnp.dtype(x.dtype).itemsize

    # Free (layout-preserving) views; gamma/beta kept in f32 for the in-kernel FMA.
    x2 = x.reshape(rows, HW)
    g2 = gamma.reshape(rows, 1).astype(jnp.float32)
    b2 = beta.reshape(rows, 1).astype(jnp.float32)

    # ---- Tile sizing: lane-dense, ~target_block_bytes per x block. ----
    # Sublane alignment: 8 for 32-bit, 16 for 2-byte, 32 for 1-byte dtypes.
    row_align = {4: 8, 2: 16, 1: 32}.get(itemsize, 8)
    # Lane tile: full spatial extent (rounded to 128) when small, else 2048.
    l_tile = min(_round_up(HW, 128), 2048)
    # Row tile: fill the byte budget, aligned to sublanes, clamped to the array.
    r_tile = max(1, target_block_bytes // (l_tile * itemsize))
    r_tile = max(row_align, (r_tile // row_align) * row_align)
    r_tile = min(r_tile, _round_up(rows, row_align))

    grid = (pl.cdiv(rows, r_tile), pl.cdiv(HW, l_tile))

    # ---- VMEM budget: double-buffered x + out blocks, plus gamma/beta columns
    # (which pad to a full 128-lane tile in VMEM).  Cap for v7x's 64 MiB/TC. ----
    blk_bytes = r_tile * l_tile * itemsize
    col_bytes = r_tile * 128 * 4  # f32 gamma/beta columns
    needed = 2 * (2 * blk_bytes) + 2 * (2 * col_bytes)
    try:
        physical_vmem = pltpu.get_tpu_info().vmem_capacity_bytes
    except Exception:
        physical_vmem = 64 * 1024 * 1024  # be conservative (v7x per-TC)
    vmem_cap = min(48 * 1024 * 1024, int(0.75 * physical_vmem))
    vmem_limit = min(max(int(1.5 * needed), 16 * 1024 * 1024), vmem_cap)

    cost = pl.CostEstimate(
        flops=2 * rows * HW,
        bytes_accessed=2 * rows * HW * itemsize + 2 * rows * 4,
        transcendentals=0,
    )

    out2 = pl.pallas_call(
        _film_kernel,
        out_shape=jax.ShapeDtypeStruct((rows, HW), x.dtype),
        grid=grid,
        in_specs=[
            pl.BlockSpec((r_tile, l_tile), lambda i, j: (i, j)),
            # gamma/beta: block index constant over the innermost (lane) grid
            # axis -> stays resident in VMEM instead of re-DMA'd every step.
            pl.BlockSpec((r_tile, 1), lambda i, j: (i, 0)),
            pl.BlockSpec((r_tile, 1), lambda i, j: (i, 0)),
        ],
        out_specs=pl.BlockSpec((r_tile, l_tile), lambda i, j: (i, j)),
        compiler_params=pltpu.CompilerParams(
            dimension_semantics=("parallel", "parallel"),
            vmem_limit_bytes=vmem_limit,
        ),
        cost_estimate=cost,
    )(x2, g2, b2)

    return out2.reshape(N, C, H, W)


if __name__ == "__main__":
    key = jax.random.PRNGKey(0)
    kx, kg, kb = jax.random.split(key, 3)

    # Small shapes consistent with the module.
    N, C, H, W = 2, 4, 16, 16
    x = jax.random.normal(kx, (N, C, H, W), dtype=jnp.float32)
    gamma = jax.random.normal(kg, (N, C), dtype=jnp.float32)
    beta = jax.random.normal(kb, (N, C), dtype=jnp.float32)

    out = jax.block_until_ready(film(x, gamma, beta))
    ref = gamma[:, :, None, None] * x + beta[:, :, None, None]
    assert out.shape == (N, C, H, W)
    assert jnp.allclose(out, ref, atol=1e-6, rtol=1e-6)

    # Exercise the boundary-block (non-aligned) path: H*W not a multiple of
    # 128 and N*C not a multiple of 8 — no wrapper-side padding anymore.
    N2, C2, H2, W2 = 2, 3, 14, 14
    kx2, kg2, kb2 = jax.random.split(kb, 3)
    x2 = jax.random.normal(kx2, (N2, C2, H2, W2), dtype=jnp.float32)
    g2 = jax.random.normal(kg2, (N2, C2), dtype=jnp.float32)
    b2 = jax.random.normal(kb2, (N2, C2), dtype=jnp.float32)
    out2 = jax.block_until_ready(film(x2, g2, b2))
    ref2 = g2[:, :, None, None] * x2 + b2[:, :, None, None]
    assert out2.shape == (N2, C2, H2, W2)
    assert jnp.allclose(out2, ref2, atol=1e-6, rtol=1e-6)

    # bf16 path: f32 in-kernel FMA, single rounding on the store.
    xb = x.astype(jnp.bfloat16)
    outb = jax.block_until_ready(film(xb, gamma, beta))
    refb = (gamma[:, :, None, None] * xb.astype(jnp.float32)
            + beta[:, :, None, None]).astype(jnp.bfloat16)
    assert outb.dtype == jnp.bfloat16
    assert jnp.allclose(outb.astype(jnp.float32), refb.astype(jnp.float32),
                        atol=1e-2, rtol=1e-2)

    print("KERNEL_OK")
</pallas_src>

<mosaic_0001>
module attributes {stable_mosaic.version = 11 : i64} {
  func.func @_film_kernel(%arg0: i32, %arg1: i32, %arg2: memref<8x256xf32, #tpu.memory_space<vmem>>, %arg3: memref<8x1xf32, #tpu.memory_space<vmem>>, %arg4: memref<8x1xf32, #tpu.memory_space<vmem>>, %arg5: memref<8x256xf32, #tpu.memory_space<vmem>>) attributes {dimension_semantics = [#tpu.dimension_semantics<parallel>, #tpu.dimension_semantics<parallel>], iteration_bounds = array<i64: 1, 1>, scalar_prefetch = 0 : i64, scratch_operands = 0 : i64, tpu.core_type = #tpu.core_type<tc>, window_params = [{transform_indices = @transform_0, window_bounds = array<i64: 8, 256>}, {transform_indices = @transform_1, window_bounds = array<i64: 8, 1>}, {transform_indices = @transform_2, window_bounds = array<i64: 8, 1>}, {transform_indices = @transform_3, window_bounds = array<i64: 8, 256>}]} {
    %c0 = arith.constant 0 : index
    %c0_0 = arith.constant 0 : index
    %0 = vector.load %arg2[%c0, %c0_0] : memref<8x256xf32, #tpu.memory_space<vmem>>, vector<8x256xf32>
    %c0_1 = arith.constant 0 : index
    %c0_2 = arith.constant 0 : index
    %1 = vector.load %arg3[%c0_1, %c0_2] : memref<8x1xf32, #tpu.memory_space<vmem>>, vector<8x1xf32>
    %2 = vector.broadcast %1 : vector<8x1xf32> to vector<8x256xf32>
    %3 = arith.mulf %2, %0 : vector<8x256xf32>
    %c0_3 = arith.constant 0 : index
    %c0_4 = arith.constant 0 : index
    %4 = vector.load %arg4[%c0_3, %c0_4] : memref<8x1xf32, #tpu.memory_space<vmem>>, vector<8x1xf32>
    %5 = vector.broadcast %4 : vector<8x1xf32> to vector<8x256xf32>
    %6 = arith.addf %3, %5 : vector<8x256xf32>
    %c0_5 = arith.constant 0 : index
    %c0_6 = arith.constant 0 : index
    %7 = vector.load %arg5[%c0_5, %c0_6] : memref<8x256xf32, #tpu.memory_space<vmem>>, vector<8x256xf32>
    tpu.vector_store %arg5[%c0_5, %c0_6], %6 {strides = array<i32>} : memref<8x256xf32, #tpu.memory_space<vmem>>, vector<8x256xf32>,
    return
  }
  func.func @transform_0(%arg0: i32, %arg1: i32) -> (i32, i32) {
    %c0_i32 = arith.constant 0 : i32
    return %arg0, %arg1 : i32, i32
  }
  func.func @transform_1(%arg0: i32, %arg1: i32) -> (i32, i32) {
    %c0_i32 = arith.constant 0 : i32
    %c0_i32_0 = arith.constant 0 : i32
    return %arg0, %c0_i32 : i32, i32
  }
  func.func @transform_2(%arg0: i32, %arg1: i32) -> (i32, i32) {
    %c0_i32 = arith.constant 0 : i32
    %c0_i32_0 = arith.constant 0 : i32
    return %arg0, %c0_i32 : i32, i32
  }
  func.func @transform_3(%arg0: i32, %arg1: i32) -> (i32, i32) {
    %c0_i32 = arith.constant 0 : i32
    return %arg0, %arg1 : i32, i32
  }
}

</mosaic_0001>

<llo_original>
// kernel: tpu_custom_call.1
$region0: #{tpu_custom_call.1}
  #allocation0 [shape = 'u32[]', space=smem, size = 0x4, offset = 0x4, fixed_abs, tag = 'smem constant byte address 0x4 - core index']
  #allocation1 [shape = 'u32[72,128]{1,0:T(1,128)}', space=vmem, size = 0x9000, scoped, tag = 'internal scratch']
  %s0 = inlined_call_operand.vmem [shape: f32[8,256], index: 0, kind: input, shape index: {}]
  %s1 = inlined_call_operand.vmem [shape: f32[8,1], index: 1, kind: input, shape index: {}]
  %s2 = inlined_call_operand.vmem [shape: f32[8,1], index: 2, kind: input, shape index: {}]
  %s3 = inlined_call_operand.hbm [shape: f32[8,256], index: 3, kind: output, shape index: {}]
  %s4 = sld [smem:[#allocation0]]
  $region22: #{tpu_custom_call.1} parent=0
    _
  %s6 = ssub.s32 1, %s4
  %s7 = scalar_select 0, %s6, %s4
  $region1: #{tpu_custom_call.1} parent=0
    #allocation2 [shape = 'u8[8192]{0}', space=vmem, size = 0x2000, scoped, tag = 'output window, operand 0, single buffered']
    #allocation3 [shape = 's32[1]{0}', space=sflag, size = 0x4, scoped, tag = 'scoped memory for tpu_custom_call.1']
    %8 = vsyncpa [#allocation3], 0
    // Predicated region
    $region2: #{tpu_custom_call.1} parent=1 // pred_check
      _
    $region3: #{tpu_custom_call.1} parent=1 // pred_check_branch
      %10 = sbr.rel (0) target = $region5
    $region4: #{tpu_custom_call.1} parent=1 // pred_region
      _
    $region5: #{tpu_custom_call.1} parent=1 // pred_fallthru
      _
    // Predicated region
    $region6: #{tpu_custom_call.1} parent=1 // pred_check
      _
    $region7: #{tpu_custom_call.1} parent=1 // pred_check_branch
      %12 = sbr.rel (0) target = $region9
    $region8: #{tpu_custom_call.1} parent=1 // pred_region
      _
    $region9: #{tpu_custom_call.1} parent=1 // pred_fallthru
      _
    // Predicated region
    $region10: #{tpu_custom_call.1} parent=1 // pred_check
      _
    $region11: #{tpu_custom_call.1} parent=1 // pred_check_branch
      %14 = sbr.rel (0) target = $region13
    $region12: #{tpu_custom_call.1} parent=1 // pred_region
      _
    $region13: #{tpu_custom_call.1} parent=1 // pred_fallthru
      _
    %v15 = vld [vmem:[%s0] sm:$0xff]
    %v16 = vld [vmem:[%s0 + $0x8] sm:$0xff]
    %v17 = vld [vmem:[%s1] sm:$0xff]
    %19 = vset.pattern.permute.xlu0 0
    %20 = vperm.xlu0 %19, %v17
    %v21 = vpop.permute.xlu0 %20
    %v23 = vmul.f32 %v21, %v15
    %v24 = vmul.f32 %v21, %v16
    %v25 = vld [vmem:[%s2] sm:$0xff]
    %27 = vset.pattern.permute.xlu0 0
    %28 = vperm.xlu0 %27, %v25
    %v29 = vpop.permute.xlu0 %28
    %v31 = vadd.f32 %v23, %v29
    %v32 = vadd.f32 %v24, %v29
    %33 = vst [vmem:[#allocation2] sm:$0xff] %v31
    %34 = vst [vmem:[#allocation2 + $0x8] sm:$0xff] %v32
    // Predicated region
    $region14: #{tpu_custom_call.1} parent=1 // pred_check
      _
    $region15: #{tpu_custom_call.1} parent=1 // pred_check_branch
      %36 = sbr.rel (0) target = $region17
    $region16: #{tpu_custom_call.1} parent=1 // pred_region
      %38 = vsyncadd [#allocation3], 0
      %s40 = sshll.u32 [#allocation2], 4
      %s41 = int_to_ptr.vmem [resolvable:$true] %s40
      %s42 = sshll.u32 %s3, 4
      %s43 = int_to_ptr.hbm [resolvable:$true] %s42
      %45 = dma.vmem_to_hbm [thread:$0]  %s41, 256, %s43, [#allocation3]
    $region17: #{tpu_custom_call.1} parent=1 // pred_fallthru
      _
    // Predicated region
    $region18: #{tpu_custom_call.1} parent=1 // pred_check
      _
    $region19: #{tpu_custom_call.1} parent=1 // pred_check_branch
      %47 = sbr.rel (0) target = $region21
    $region20: #{tpu_custom_call.1} parent=1 // pred_region
      %49 = dma.done [#allocation3], 256
    $region21: #{tpu_custom_call.1} parent=1 // pred_fallthru
      _
    %50 = vsyncpa [#allocation3], 1

</llo_original>
